<compile_context>
chip_gen: v7x
topology: tpu7x:2x2x1
jax: 0.10.0
libtpu: 0.0.40
codegen_flags: <defaults>
</compile_context>

<pallas_src>
import functools

import jax
import jax.numpy as jnp
from jax.experimental import pallas as pl
from jax.experimental.pallas import tpu as pltpu


def _round_up(n: int, m: int) -> int:
    return ((n + m - 1) // m) * m


def _block_diag(w, g):
    """(k, m) -> (g*k, g*m) block-diagonal replication (host-side, tiny)."""
    return jnp.kron(jnp.eye(g, dtype=w.dtype), w)


def _mlp_kernel(x_ref, w1_ref, b1_ref, w2_ref, b2_ref, o_ref):
    # fc1 (enc pad + residual + time_step pre-folded into w1/b1), f32 accumulate.
    h = jnp.dot(x_ref[...], w1_ref[...], preferred_element_type=jnp.float32)
    h = jnp.maximum(h + b1_ref[...], 0.0)
    # fc2 (residual + time_step pre-folded into w2/b2).
    h = jnp.dot(h.astype(w2_ref.dtype), w2_ref[...],
                preferred_element_type=jnp.float32)
    h = jnp.maximum(h + b2_ref[...], 0.0)
    # dec = nn.Identity(); single store, lane-dense (G*hid lanes).
    o_ref[...] = h.astype(o_ref.dtype)


def mlp_forward(x, w1, b1, w2, b2, *, time_step=0.5, residual=True,
                matmul_dtype=jnp.bfloat16, block_rows=2048):
    """Fused MLP forward.

    x      : (N, in_dim)  node features (data.x_comp)
    w1, w2 : (hid, hid)   fc weights, pre-transposed to (in_features, out_features)
    b1, b2 : (hid,) or (1, hid) biases
    """
    n, in_dim = x.shape
    hid = w1.shape[0]
    t = float(time_step)

    # identity encoder: hid >= in_dim -> zero-pad (folded into W1_eff below);
    #                   hid <  in_dim -> truncation.
    if hid < in_dim:
        x = x[:, :hid]
        in_dim = hid

    # ---- fold enc pad / residual / time_step into effective weights (in f32) ----
    w1_f = w1.astype(jnp.float32)
    w2_f = w2.astype(jnp.float32)
    b1_f = jnp.reshape(b1, (1, hid)).astype(jnp.float32)
    b2_f = jnp.reshape(b2, (1, hid)).astype(jnp.float32)
    if residual:
        p_pad = jnp.zeros((in_dim, hid), jnp.float32).at[:, :in_dim].set(
            jnp.eye(in_dim, dtype=jnp.float32))
        w1_eff = p_pad + t * w1_f[:in_dim, :]
        b1_eff = t * b1_f
        w2_eff = jnp.eye(hid, dtype=jnp.float32) + t * w2_f
        b2_eff = t * b2_f
    else:
        w1_eff = w1_f[:in_dim, :]
        b1_eff = b1_f
        w2_eff = w2_f
        b2_eff = b2_f

    # ---- lane packing: G row-groups side by side so the output is 128-lane dense ----
    g = 128 // hid if (hid <= 128 and 128 % hid == 0) else 1
    w1_blk = _block_diag(w1_eff, g).astype(matmul_dtype)      # (g*in_dim, g*hid)
    w2_blk = _block_diag(w2_eff, g).astype(matmul_dtype)      # (g*hid,    g*hid)
    b1_blk = jnp.tile(b1_eff, (1, g))                         # (1, g*hid) f32
    b2_blk = jnp.tile(b2_eff, (1, g))                         # (1, g*hid) f32

    x = x.astype(matmul_dtype)                                # bf16 input DMA
    n_g = _round_up(n, g)
    if n_g != n:
        x = jnp.pad(x, ((0, n_g - n), (0, 0)))
    rows = n_g // g
    x_pk = x.reshape(rows, g * in_dim)                        # free HBM reinterpretation

    # ---- row tiling: big tiles, multiple of 16 sublanes, >= 2 grid steps if possible ----
    tm = _round_up(min(block_rows, rows), 16)
    if pl.cdiv(rows, tm) < 2 and rows >= 32:
        tm = _round_up(pl.cdiv(rows, 2), 16)                  # keep both v7x TCs busy
    rows_pad = _round_up(rows, tm)
    if rows_pad != rows:
        x_pk = jnp.pad(x_pk, ((0, rows_pad - rows), (0, 0)))

    out = pl.pallas_call(
        _mlp_kernel,
        out_shape=jax.ShapeDtypeStruct((rows_pad, g * hid), jnp.float32),
        grid_spec=pltpu.PrefetchScalarGridSpec(
            num_scalar_prefetch=0,
            grid=(rows_pad // tm,),
            in_specs=[
                pl.BlockSpec((tm, g * in_dim), lambda i: (i, 0)),   # x: row-tiled, pipelined
                pl.BlockSpec((g * in_dim, g * hid), lambda i: (0, 0)),  # w1_eff: resident
                pl.BlockSpec((1, g * hid), lambda i: (0, 0)),           # b1_eff: resident
                pl.BlockSpec((g * hid, g * hid), lambda i: (0, 0)),     # w2_eff: resident
                pl.BlockSpec((1, g * hid), lambda i: (0, 0)),           # b2_eff: resident
            ],
            out_specs=pl.BlockSpec((tm, g * hid), lambda i: (i, 0)),
        ),
        compiler_params=pltpu.CompilerParams(
            dimension_semantics=("parallel",),       # row tiles independent -> megacore
            vmem_limit_bytes=32 * 1024 * 1024,       # ample headroom on v5e/v6e/v7x
        ),
    )(x_pk, w1_blk, b1_blk, w2_blk, b2_blk)

    out = out.reshape(rows_pad * g, hid)             # undo lane packing (row-major)
    return out[:n]


def reference_forward(x, w1, b1, w2, b2, *, time_step=0.5, residual=True):
    n, in_dim = x.shape
    hid = w1.shape[0]
    if hid >= in_dim:
        h = jnp.pad(x, ((0, 0), (0, hid - in_dim)))
    else:
        h = x[:, :hid]
    f1 = h @ w1 + jnp.reshape(b1, (1, hid))
    h = h + time_step * f1 if residual else f1
    h = jnp.maximum(h, 0.0)
    f2 = h @ w2 + jnp.reshape(b2, (1, hid))
    h = h + time_step * f2 if residual else f2
    return jnp.maximum(h, 0.0)


if __name__ == "__main__":
    # opt = {'enc': 'identity', 'non_lin': 'relu', 'residual': True,
    #        'time_step': 0.5, 'dropout': 0.0, 'hidden_dim': 32}
    N, IN_DIM, HID_DIM = 1000, 16, 32        # exercises G=4 lane packing, padding, 2-step grid
    TIME_STEP, RESIDUAL = 0.5, True

    key = jax.random.PRNGKey(0)
    kx, k1, kb1, k2, kb2 = jax.random.split(key, 5)

    # node features (data.x_comp)
    x = jax.random.normal(kx, (N, IN_DIM), dtype=jnp.float32)

    # fc1 / fc2: Linear(hid, hid), PyTorch-style uniform(-1/sqrt(hid), 1/sqrt(hid)) init,
    # stored pre-transposed as (in_features, out_features).
    bound = 1.0 / float(jnp.sqrt(jnp.float32(HID_DIM)))
    w1 = jax.random.uniform(k1, (HID_DIM, HID_DIM), jnp.float32, -bound, bound)
    b1 = jax.random.uniform(kb1, (HID_DIM,), jnp.float32, -bound, bound)
    w2 = jax.random.uniform(k2, (HID_DIM, HID_DIM), jnp.float32, -bound, bound)
    b2 = jax.random.uniform(kb2, (HID_DIM,), jnp.float32, -bound, bound)

    ref = reference_forward(x, w1, b1, w2, b2, time_step=TIME_STEP, residual=RESIDUAL)

    # 1) Exact-semantics check: f32 matmuls (fold also in f32), tight tolerance.
    out_f32 = mlp_forward(x, w1, b1, w2, b2, time_step=TIME_STEP, residual=RESIDUAL,
                          matmul_dtype=jnp.float32, block_rows=2048)
    out_f32 = jax.block_until_ready(out_f32)
    assert out_f32.shape == (N, HID_DIM)
    assert jnp.allclose(out_f32, ref, atol=1e-4, rtol=1e-4)

    # 2) Performance config: bf16 operands / bf16 input DMA (f32 accumulation).
    out_bf16 = mlp_forward(x, w1, b1, w2, b2, time_step=TIME_STEP, residual=RESIDUAL,
                           matmul_dtype=jnp.bfloat16, block_rows=2048)
    out_bf16 = jax.block_until_ready(out_bf16)
    assert out_bf16.shape == (N, HID_DIM)
    assert jnp.allclose(out_bf16, ref, atol=5e-2, rtol=5e-2)

    # 3) Tiny-N path (single grid step, rows padded inside the wrapper).
    out_small = mlp_forward(x[:8], w1, b1, w2, b2, time_step=TIME_STEP, residual=RESIDUAL)
    out_small = jax.block_until_ready(out_small)
    assert out_small.shape == (8, HID_DIM)
    assert jnp.allclose(out_small, ref[:8], atol=5e-2, rtol=5e-2)

    # 4) Non-residual branch.
    ref_nr = reference_forward(x, w1, b1, w2, b2, time_step=TIME_STEP, residual=False)
    out_nr = mlp_forward(x, w1, b1, w2, b2, time_step=TIME_STEP, residual=False,
                         matmul_dtype=jnp.float32)
    out_nr = jax.block_until_ready(out_nr)
    assert jnp.allclose(out_nr, ref_nr, atol=1e-4, rtol=1e-4)

    print("KERNEL_OK")
</pallas_src>

<mosaic_0001>
module attributes {stable_mosaic.version = 11 : i64} {
  func.func @_mlp_kernel(%arg0: i32, %arg1: memref<128x64xf32, #tpu.memory_space<vmem>>, %arg2: memref<64x128xf32, #tpu.memory_space<vmem>>, %arg3: memref<1x128xf32, #tpu.memory_space<vmem>>, %arg4: memref<128x128xf32, #tpu.memory_space<vmem>>, %arg5: memref<1x128xf32, #tpu.memory_space<vmem>>, %arg6: memref<128x128xf32, #tpu.memory_space<vmem>>) attributes {dimension_semantics = [#tpu.dimension_semantics<parallel>], iteration_bounds = array<i64: 2>, scalar_prefetch = 0 : i64, scratch_operands = 0 : i64, tpu.core_type = #tpu.core_type<tc>, window_params = [{transform_indices = @transform_0, window_bounds = array<i64: 128, 64>}, {pipeline_mode = #tpu.pipeline_mode<synchronous>, transform_indices = @transform_1, window_bounds = array<i64: 64, 128>}, {pipeline_mode = #tpu.pipeline_mode<synchronous>, transform_indices = @transform_2, window_bounds = array<i64: 1, 128>}, {pipeline_mode = #tpu.pipeline_mode<synchronous>, transform_indices = @transform_3, window_bounds = array<i64: 128, 128>}, {pipeline_mode = #tpu.pipeline_mode<synchronous>, transform_indices = @transform_4, window_bounds = array<i64: 1, 128>}, {transform_indices = @transform_5, window_bounds = array<i64: 128, 128>}]} {
    %c0 = arith.constant 0 : index
    %c0_0 = arith.constant 0 : index
    %0 = vector.load %arg1[%c0, %c0_0] : memref<128x64xf32, #tpu.memory_space<vmem>>, vector<128x64xf32>
    %c0_1 = arith.constant 0 : index
    %c0_2 = arith.constant 0 : index
    %1 = vector.load %arg2[%c0_1, %c0_2] : memref<64x128xf32, #tpu.memory_space<vmem>>, vector<64x128xf32>
    %cst = arith.constant dense<0.000000e+00> : vector<128x128xf32>
    %2 = tpu.matmul %0, %1, %cst {dimension_numbers = #tpu.dot_dimension_numbers<[1], [0], [0], [1], [0, 0, 1, 1], [], []>} : vector<128x64xf32>, vector<64x128xf32>, vector<128x128xf32> -> vector<128x128xf32>
    %c0_3 = arith.constant 0 : index
    %c0_4 = arith.constant 0 : index
    %3 = vector.load %arg3[%c0_3, %c0_4] : memref<1x128xf32, #tpu.memory_space<vmem>>, vector<1x128xf32>
    %4 = vector.broadcast %3 : vector<1x128xf32> to vector<128x128xf32>
    %5 = arith.addf %2, %4 : vector<128x128xf32>
    %cst_5 = arith.constant 0.000000e+00 : f32
    %6 = vector.broadcast %cst_5 : f32 to vector<128x128xf32>
    %7 = arith.maximumf %5, %6 : vector<128x128xf32>
    %c0_6 = arith.constant 0 : index
    %c0_7 = arith.constant 0 : index
    %8 = vector.load %arg4[%c0_6, %c0_7] : memref<128x128xf32, #tpu.memory_space<vmem>>, vector<128x128xf32>
    %cst_8 = arith.constant dense<0.000000e+00> : vector<128x128xf32>
    %9 = tpu.matmul %7, %8, %cst_8 {dimension_numbers = #tpu.dot_dimension_numbers<[1], [0], [0], [1], [0, 0, 1, 1], [], []>} : vector<128x128xf32>, vector<128x128xf32>, vector<128x128xf32> -> vector<128x128xf32>
    %c0_9 = arith.constant 0 : index
    %c0_10 = arith.constant 0 : index
    %10 = vector.load %arg5[%c0_9, %c0_10] : memref<1x128xf32, #tpu.memory_space<vmem>>, vector<1x128xf32>
    %11 = vector.broadcast %10 : vector<1x128xf32> to vector<128x128xf32>
    %12 = arith.addf %9, %11 : vector<128x128xf32>
    %cst_11 = arith.constant 0.000000e+00 : f32
    %13 = vector.broadcast %cst_11 : f32 to vector<128x128xf32>
    %14 = arith.maximumf %12, %13 : vector<128x128xf32>
    %c0_12 = arith.constant 0 : index
    %c0_13 = arith.constant 0 : index
    %15 = vector.load %arg6[%c0_12, %c0_13] : memref<128x128xf32, #tpu.memory_space<vmem>>, vector<128x128xf32>
    tpu.vector_store %arg6[%c0_12, %c0_13], %14 {strides = array<i32>} : memref<128x128xf32, #tpu.memory_space<vmem>>, vector<128x128xf32>,
    return
  }
  func.func @transform_0(%arg0: i32) -> (i32, i32) {
    %c0_i32 = arith.constant 0 : i32
    %c0_i32_0 = arith.constant 0 : i32
    return %arg0, %c0_i32 : i32, i32
  }
  func.func @transform_1(%arg0: i32) -> (i32, i32) {
    %c0_i32 = arith.constant 0 : i32
    %c0_i32_0 = arith.constant 0 : i32
    %c0_i32_1 = arith.constant 0 : i32
    return %c0_i32, %c0_i32_0 : i32, i32
  }
  func.func @transform_2(%arg0: i32) -> (i32, i32) {
    %c0_i32 = arith.constant 0 : i32
    %c0_i32_0 = arith.constant 0 : i32
    %c0_i32_1 = arith.constant 0 : i32
    return %c0_i32, %c0_i32_0 : i32, i32
  }
  func.func @transform_3(%arg0: i32) -> (i32, i32) {
    %c0_i32 = arith.constant 0 : i32
    %c0_i32_0 = arith.constant 0 : i32
    %c0_i32_1 = arith.constant 0 : i32
    return %c0_i32, %c0_i32_0 : i32, i32
  }
  func.func @transform_4(%arg0: i32) -> (i32, i32) {
    %c0_i32 = arith.constant 0 : i32
    %c0_i32_0 = arith.constant 0 : i32
    %c0_i32_1 = arith.constant 0 : i32
    return %c0_i32, %c0_i32_0 : i32, i32
  }
  func.func @transform_5(%arg0: i32) -> (i32, i32) {
    %c0_i32 = arith.constant 0 : i32
    %c0_i32_0 = arith.constant 0 : i32
    return %arg0, %c0_i32 : i32, i32
  }
}

</mosaic_0001>

<llo_original>
// kernel: tpu_custom_call.1
$region0: #{tpu_custom_call.1}
  #allocation0 [shape = 'u32[]', space=smem, size = 0x4, offset = 0x4, fixed_abs, tag = 'smem constant byte address 0x4 - core index']
  #allocation1 [shape = 'u32[144,128]{1,0:T(1,128)}', space=vmem, size = 0x12000, scoped, tag = 'internal scratch']
  %s0 = inlined_call_operand.vmem [shape: f32[256,64], index: 0, kind: input, shape index: {}]
  %s1 = inlined_call_operand.vmem [shape: f32[64,128], index: 1, kind: input, shape index: {}]
  %s2 = inlined_call_operand.vmem [shape: f32[1,128], index: 2, kind: input, shape index: {}]
  %s3 = inlined_call_operand.vmem [shape: f32[128,128], index: 3, kind: input, shape index: {}]
  %s4 = inlined_call_operand.vmem [shape: f32[1,128], index: 4, kind: input, shape index: {}]
  %s5 = inlined_call_operand.hbm [shape: f32[256,128], index: 5, kind: output, shape index: {}]
  %s6 = sld [smem:[#allocation0]]
  $region53: #{tpu_custom_call.1} parent=0
    _
  %s8 = ssub.s32 1, %s6
  %s9 = scalar_select 0, %s8, %s6
  $region1: #{tpu_custom_call.1} parent=0
    #allocation2 [shape = 'u8[131072]{0}', space=vmem, size = 0x20000, scoped, tag = 'output window, operand 0']
    #allocation3 [shape = 's32[2]{0}', space=sflag, size = 0x8, scoped, tag = 'scoped memory for tpu_custom_call.1']
    %10 = vsyncpa [#allocation3], 0
    %s11 = scalar_lea.sflag [#allocation3], 1
    %12 = vsyncpa %s11, 0
    loop: start=0, step=1, limit=4
    $region2: #{tpu_custom_call.1} parent=1 // loop_pre_header
      _
    $region3: #{tpu_custom_call.1} parent=1 // loop_header
      %s14 = sphi 0, %s18
      %p15 = scmp.ge.s32.totalorder %s14, 4
      %s24 = sphi 0, %s26
      %s27 = sphi 0, %s24
      %s28 = sphi 0, %s27
      %s44 = sphi 0, %s28
      %s48 = sphi 0, %s48
      %s50 = sphi 0, %s48
      %s51 = sphi 0, %s50
      %s65 = sphi 0, %s51
      %s69 = sphi 0, %s69
      %s71 = sphi 0, %s69
      %s72 = sphi 0, %s71
      %s86 = sphi 0, %s72
      %s90 = sphi 0, %s90
      %s92 = sphi 0, %s90
      %s93 = sphi 0, %s92
      %s107 = sphi 0, %s93
      %s111 = sphi 0, %s111
      %s113 = sphi 0, %s111
      %s114 = sphi 0, %s113
      %s128 = sphi 0, %s114
      %s134 = sphi 0, %s136
      %s137 = sphi 0, %s134
      %s138 = sphi 0, %s137
      %s154 = sphi 0, %s138
    $region4: #{tpu_custom_call.1} parent=1 // loop_header_branch
      %17 = sbr.rel (%p15) target = $region8
    $region5: #{tpu_custom_call.1} parent=1 // loop_body
      %s19 = ssub.s32 %s14, 1
      %s20 = ssub.s32 %s14, 2
      %s21 = sadd.s32 %s14, 1
      %s22 = ssub.s32 %s14, %s21
      %p23 = scmp.eq.s32.totalorder %s22, 0
      %s25 = sadd.s32 %s24, 1
      %s26 = scalar_select %p23, %s24, %s25
      %p29 = pneg %p23
      %p30 = scmp.eq.s32.totalorder %s14, 1
      %p31 = por %p29, %p30
      %p32 = scmp.ne.s32.totalorder %s24, %s27
      %p33 = scmp.eq.s32.totalorder %s14, 0
      %p34 = por %p32, %p33
      %p35 = scmp.ne.s32.totalorder %s24, %s27
      %p36 = scmp.eq.s32.totalorder %s19, 1
      %p37 = por %p35, %p36
      %p38 = scmp.ne.s32.totalorder %s27, %s28
      %p39 = scmp.eq.s32.totalorder %s19, 0
      %p40 = por %p38, %p39
      %p41 = scmp.ne.s32.totalorder %s27, %s28
      %p42 = scmp.eq.s32.totalorder %s20, 1
      %p43 = por %p41, %p42
      %p45 = scmp.ne.s32.totalorder %s28, %s44
      %p46 = scmp.eq.s32.totalorder %s20, 0
      %p47 = por %p45, %p46
      %s49 = sadd.s32 %s48, 1
      %p52 = scmp.eq.s32.totalorder %s14, 1
      %p53 = scmp.ne.s32.totalorder %s48, %s50
      %p54 = scmp.eq.s32.totalorder %s14, 0
      %p55 = por %p53, %p54
      %p56 = scmp.ne.s32.totalorder %s48, %s50
      %p57 = scmp.eq.s32.totalorder %s19, 1
      %p58 = por %p56, %p57
      %p59 = scmp.ne.s32.totalorder %s50, %s51
      %p60 = scmp.eq.s32.totalorder %s19, 0
      %p61 = por %p59, %p60
      %p62 = scmp.ne.s32.totalorder %s50, %s51
      %p63 = scmp.eq.s32.totalorder %s20, 1
      %p64 = por %p62, %p63
      %p66 = scmp.ne.s32.totalorder %s51, %s65
      %p67 = scmp.eq.s32.totalorder %s20, 0
      %p68 = por %p66, %p67
      %s70 = sadd.s32 %s69, 1
      %p73 = scmp.eq.s32.totalorder %s14, 1
      %p74 = scmp.ne.s32.totalorder %s69, %s71
      %p75 = scmp.eq.s32.totalorder %s14, 0
      %p76 = por %p74, %p75
      %p77 = scmp.ne.s32.totalorder %s69, %s71
      %p78 = scmp.eq.s32.totalorder %s19, 1
      %p79 = por %p77, %p78
      %p80 = scmp.ne.s32.totalorder %s71, %s72
      %p81 = scmp.eq.s32.totalorder %s19, 0
      %p82 = por %p80, %p81
      %p83 = scmp.ne.s32.totalorder %s71, %s72
      %p84 = scmp.eq.s32.totalorder %s20, 1
      %p85 = por %p83, %p84
      %p87 = scmp.ne.s32.totalorder %s72, %s86
      %p88 = scmp.eq.s32.totalorder %s20, 0
      %p89 = por %p87, %p88
      %s91 = sadd.s32 %s90, 1
      %p94 = scmp.eq.s32.totalorder %s14, 1
      %p95 = scmp.ne.s32.totalorder %s90, %s92
      %p96 = scmp.eq.s32.totalorder %s14, 0
      %p97 = por %p95, %p96
      %p98 = scmp.ne.s32.totalorder %s90, %s92
      %p99 = scmp.eq.s32.totalorder %s19, 1
      %p100 = por %p98, %p99
      %p101 = scmp.ne.s32.totalorder %s92, %s93
      %p102 = scmp.eq.s32.totalorder %s19, 0
      %p103 = por %p101, %p102
      %p104 = scmp.ne.s32.totalorder %s92, %s93
      %p105 = scmp.eq.s32.totalorder %s20, 1
      %p106 = por %p104, %p105
      %p108 = scmp.ne.s32.totalorder %s93, %s107
      %p109 = scmp.eq.s32.totalorder %s20, 0
      %p110 = por %p108, %p109
      %s112 = sadd.s32 %s111, 1
      %p115 = scmp.eq.s32.totalorder %s14, 1
      %p116 = scmp.ne.s32.totalorder %s111, %s113
      %p117 = scmp.eq.s32.totalorder %s14, 0
      %p118 = por %p116, %p117
      %p119 = scmp.ne.s32.totalorder %s111, %s113
      %p120 = scmp.eq.s32.totalorder %s19, 1
      %p121 = por %p119, %p120
      %p122 = scmp.ne.s32.totalorder %s113, %s114
      %p123 = scmp.eq.s32.totalorder %s19, 0
      %p124 = por %p122, %p123
      %p125 = scmp.ne.s32.totalorder %s113, %s114
      %p126 = scmp.eq.s32.totalorder %s20, 1
      %p127 = por %p125, %p126
      %p129 = scmp.ne.s32.totalorder %s114, %s128
      %p130 = scmp.eq.s32.totalorder %s20, 0
      %p131 = por %p129, %p130
      %s132 = ssub.s32 %s14, %s21
      %p133 = scmp.eq.s32.totalorder %s132, 0
      %s135 = sadd.s32 %s134, 1
      %s136 = scalar_select %p133, %s134, %s135
      %p139 = pneg %p133
      %p140 = scmp.eq.s32.totalorder %s14, 1
      %p141 = por %p139, %p140
      %p142 = scmp.ne.s32.totalorder %s134, %s137
      %p143 = scmp.eq.s32.totalorder %s14, 0
      %p144 = por %p142, %p143
      %p145 = scmp.ne.s32.totalorder %s134, %s137
      %p146 = scmp.eq.s32.totalorder %s19, 1
      %p147 = por %p145, %p146
      %p148 = scmp.ne.s32.totalorder %s137, %s138
      %p149 = scmp.eq.s32.totalorder %s19, 0
      %p150 = por %p148, %p149
      %p151 = scmp.ne.s32.totalorder %s137, %s138
      %p152 = scmp.eq.s32.totalorder %s20, 1
      %p153 = por %p151, %p152
      %p155 = scmp.ne.s32.totalorder %s138, %s154
      %p156 = scmp.eq.s32.totalorder %s20, 0
      %p157 = por %p155, %p156
      %p158 = scmp.le.s32.totalorder 1, %s14
      %p159 = scmp.lt.s32.totalorder %s14, 3
      %p160 = pnand %p158, %p159
      %p161 = pneg %p160
      // Predicated region
      $region9: #{tpu_custom_call.1} parent=5 // pred_check
        _
      $region10: #{tpu_custom_call.1} parent=5 // pred_check_branch
        %163 = sbr.rel (%p160) target = $region12
      $region11: #{tpu_custom_call.1} parent=5 // pred_region
        %s164 = ssub.s32 %s14, 1
        // Predicated region
        $region13: #{tpu_custom_call.1} parent=11 // pred_check
          %p165 = pneg %p61
        $region14: #{tpu_custom_call.1} parent=11 // pred_check_branch
          %167 = sbr.rel (%p165) target = $region16
        $region15: #{tpu_custom_call.1} parent=11 // pred_region
          _
        $region16: #{tpu_custom_call.1} parent=11 // pred_fallthru
          _
        // Predicated region
        $region17: #{tpu_custom_call.1} parent=11 // pred_check
          %p168 = pneg %p82
        $region18: #{tpu_custom_call.1} parent=11 // pred_check_branch
          %170 = sbr.rel (%p168) target = $region20
        $region19: #{tpu_custom_call.1} parent=11 // pred_region
          _
        $region20: #{tpu_custom_call.1} parent=11 // pred_fallthru
          _
        // Predicated region
        $region21: #{tpu_custom_call.1} parent=11 // pred_check
          %p171 = pneg %p103
        $region22: #{tpu_custom_call.1} parent=11 // pred_check_branch
          %173 = sbr.rel (%p171) target = $region24
        $region23: #{tpu_custom_call.1} parent=11 // pred_region
          _
        $region24: #{tpu_custom_call.1} parent=11 // pred_fallthru
          _
        // Predicated region
        $region25: #{tpu_custom_call.1} parent=11 // pred_check
          %p174 = pneg %p124
        $region26: #{tpu_custom_call.1} parent=11 // pred_check_branch
          %176 = sbr.rel (%p174) target = $region28
        $region27: #{tpu_custom_call.1} parent=11 // pred_region
          _
        $region28: #{tpu_custom_call.1} parent=11 // pred_fallthru
          _
      $region12: #{tpu_custom_call.1} parent=5 // pred_fallthru
        _
      %p177 = scmp.lt.s32.totalorder %s14, 2
      // Predicated region
      $region29: #{tpu_custom_call.1} parent=5 // pred_check
        %p178 = pneg %p177
      $region30: #{tpu_custom_call.1} parent=5 // pred_check_branch
        %180 = sbr.rel (%p178) target = $region32
      $region31: #{tpu_custom_call.1} parent=5 // pred_region
        // Predicated region
        $region33: #{tpu_custom_call.1} parent=31 // pred_check
          %p181 = pneg %p34
        $region34: #{tpu_custom_call.1} parent=31 // pred_check_branch
          %183 = sbr.rel (%p181) target = $region36
        $region35: #{tpu_custom_call.1} parent=31 // pred_region
          %s184 = smul.u32 16, %s14
          %p185 = scmp.lt.s32.totalorder %s184, 31
          %s186 = scalar_select %p185, %s184, 31
          %s187 = smul.addr %s186, 8
          %s188 = scalar_lea.vmem %s0, %s187
          %s189 = smul.u32 16, %s14
        $region36: #{tpu_custom_call.1} parent=31 // pred_fallthru
          _
      $region32: #{tpu_custom_call.1} parent=5 // pred_fallthru
        _
      %p190 = scmp.le.s32.totalorder 1, %s14
      %p191 = scmp.lt.s32.totalorder %s14, 3
      %p192 = pnand %p190, %p191
      %p193 = pneg %p192
      // Predicated region
      $region37: #{tpu_custom_call.1} parent=5 // pred_check
        _
      $region38: #{tpu_custom_call.1} parent=5 // pred_check_branch
        %195 = sbr.rel (%p192) target = $region40
      $region39: #{tpu_custom_call.1} parent=5 // pred_region
        %s196 = ssub.s32 %s14, 1
        %s197 = smul.u32 16, %s19
        %p198 = scmp.lt.s32.totalorder %s197, 31
        %s199 = scalar_select %p198, %s197, 31
        %s200 = smul.addr %s199, 8
        %s201 = scalar_lea.vmem %s0, %s200
        %p202 = pneg %p40
        %p203 = pneg %p37
        %p204 = pneg %p61
        %p205 = pneg %p58
        %p206 = pneg %p82
        %p207 = pneg %p79
        %p208 = pneg %p103
        %p209 = pneg %p100
        %p210 = pneg %p124
        %p211 = pneg %p121
        %p212 = pneg %p150
        %p213 = pneg %p147
        %s214 = sand.u32 %s137, 1
        %s215 = scalar_lea.sflag [#allocation3], %s214
        %s216 = sand.u32 %s137, 1
        %s217 = smul.addr %s216, 128
        %s218 = scalar_lea.vmem [#allocation2], %s217
        %s219 = smul.u32 16, %s19
        %p220 = scmp.lt.s32.totalorder %s219, 31
        %s221 = scalar_select %p220, %s219, 31
        %s222 = smul.addr %s221, 8
        %s223 = scalar_lea.vmem %s0, %s222
        %s224 = smul.u32 16, %s19
        %s225 = smul.u32 16, %s19
        %v226 = vld [vmem:[%s223] sm:$0xff]
        %v227 = vld [vmem:[%s223 + $0x8] sm:$0xff]
        %v228 = vld [vmem:[%s223 + $0x10] sm:$0xff]
        %v229 = vld [vmem:[%s223 + $0x18] sm:$0xff]
        %v230 = vld [vmem:[%s223 + $0x20] sm:$0xff]
        %v231 = vld [vmem:[%s223 + $0x28] sm:$0xff]
        %v232 = vld [vmem:[%s223 + $0x30] sm:$0xff]
        %v233 = vld [vmem:[%s223 + $0x38] sm:$0xff]
        %v234 = vld [vmem:[%s223 + $0x40] sm:$0xff]
        %v235 = vld [vmem:[%s223 + $0x48] sm:$0xff]
        %v236 = vld [vmem:[%s223 + $0x50] sm:$0xff]
        %v237 = vld [vmem:[%s223 + $0x58] sm:$0xff]
        %v238 = vld [vmem:[%s223 + $0x60] sm:$0xff]
        %v239 = vld [vmem:[%s223 + $0x68] sm:$0xff]
        %v240 = vld [vmem:[%s223 + $0x70] sm:$0xff]
        %v241 = vld [vmem:[%s223 + $0x78] sm:$0xff]
        %v242 = vld [vmem:[%s1] sm:$0xff]
        %v243 = vld [vmem:[%s1 + $0x8] sm:$0xff]
        %v244 = vld [vmem:[%s1 + $0x10] sm:$0xff]
        %v245 = vld [vmem:[%s1 + $0x18] sm:$0xff]
        %v246 = vld [vmem:[%s1 + $0x20] sm:$0xff]
        %v247 = vld [vmem:[%s1 + $0x28] sm:$0xff]
        %v248 = vld [vmem:[%s1 + $0x30] sm:$0xff]
        %v249 = vld [vmem:[%s1 + $0x38] sm:$0xff]
        %v250 = vld [vmem:[%s2] sm:$0x1]
        %v252 = vlaneseq
        %v253 = vshrl.u32 %v252, 7
        %v254 = vsub.s32 0, %v253
        %v255 = vrot.slane %v250, %v254
        %vm257 = vcmask 523264
        %v259 = vsel %vm257, %v226, 0
        %v262 = vsel %vm257, %v227, 0
        %v265 = vsel %vm257, %v228, 0
        %v268 = vsel %vm257, %v229, 0
        %v271 = vsel %vm257, %v230, 0
        %v274 = vsel %vm257, %v231, 0
        %v277 = vsel %vm257, %v232, 0
        %v280 = vsel %vm257, %v233, 0
        %v283 = vsel %vm257, %v234, 0
        %v286 = vsel %vm257, %v235, 0
        %v289 = vsel %vm257, %v236, 0
        %v292 = vsel %vm257, %v237, 0
        %v295 = vsel %vm257, %v238, 0
        %v298 = vsel %vm257, %v239, 0
        %v301 = vsel %vm257, %v240, 0
        %v304 = vsel %vm257, %v241, 0
        %306 = vmatprep.subr.mxu0 0.0
        %307 = vmatpush1.msra.mxu0 %v242
        %308 = vmatprep.subr.mxu0 0.0
        %309 = vmatpush1.msra.mxu0 %v243
        %310 = vmatprep.subr.mxu0 0.0
        %311 = vmatpush1.msra.mxu0 %v244
        %312 = vmatprep.subr.mxu0 0.0
        %313 = vmatpush1.msra.mxu0 %v245
        %314 = vmatprep.subr.mxu0 0.0
        %315 = vmatpush1.msra.mxu0 %v246
        %316 = vmatprep.subr.mxu0 0.0
        %317 = vmatpush1.msra.mxu0 %v247
        %318 = vmatprep.subr.mxu0 0.0
        %319 = vmatpush1.msra.mxu0 %v248
        %320 = vmatprep.subr.mxu0 0.0
        %321 = vmatpush1.msra.mxu0 %v249
        %322 = vmatprep.subr.mxu0 0.0
        %323 = vmatpush1.msra.mxu0 0.0
        %324 = vmatprep.subr.mxu0 0.0
        %325 = vmatpush1.msra.mxu0 0.0
        %326 = vmatprep.subr.mxu0 0.0
        %327 = vmatpush1.msra.mxu0 0.0
        %328 = vmatprep.subr.mxu0 0.0
        %329 = vmatpush1.msra.mxu0 0.0
        %330 = vmatprep.subr.mxu0 0.0
        %331 = vmatpush1.msra.mxu0 0.0
        %332 = vmatprep.subr.mxu0 0.0
        %333 = vmatpush1.msra.mxu0 0.0
        %334 = vmatprep.subr.mxu0 0.0
        %335 = vmatpush1.msra.mxu0 0.0
        %336 = vmatprep.subr.mxu0 0.0
        %337 = vmatpush1.msra.mxu0 0.0
        %338 = vmatprep.subr.mxu0 0.0
        %339 = vmatpush1.msra.mxu0 0.0
        %340 = vmatprep.subr.mxu0 0.0
        %341 = vmatpush1.msra.mxu0 0.0
        %342 = vmatprep.subr.mxu0 0.0
        %343 = vmatpush1.msra.mxu0 0.0
        %344 = vmatprep.subr.mxu0 0.0
        %345 = vmatpush1.msra.mxu0 0.0
        %346 = vmatprep.subr.mxu0 0.0
        %347 = vmatpush1.msra.mxu0 0.0
        %348 = vmatprep.subr.mxu0 0.0
        %349 = vmatpush1.msra.mxu0 0.0
        %350 = vmatprep.subr.mxu0 0.0
        %351 = vmatpush1.msra.mxu0 0.0
        %352 = vmatprep.subr.mxu0 0.0
        %353 = vmatpush1.msra.mxu0 0.0
        %354 = vmatprep.subr.mxu0 0.0
        %355 = vmatpush1.msra.mxu0 0.0
        %356 = vmatprep.subr.mxu0 0.0
        %357 = vmatpush1.msra.mxu0 0.0
        %358 = vmatprep.subr.mxu0 0.0
        %359 = vmatpush1.msra.mxu0 0.0
        %360 = vmatprep.subr.mxu0 0.0
        %361 = vmatpush1.msra.mxu0 0.0
        %362 = vmatprep.subr.mxu0 0.0
        %363 = vmatpush1.msra.mxu0 0.0
        %364 = vmatprep.subr.mxu0 0.0
        %365 = vmatpush1.msra.mxu0 0.0
        %366 = vmatprep.subr.mxu0 0.0
        %367 = vmatpush1.msra.mxu0 0.0
        %368 = vmatprep.subr.mxu0 0.0
        %369 = vmatpush1.msra.mxu0 0.0
        %370 = vmatprep.mubr.f32.mxu0 0.0
        %371 = vmatmul.mubr.f32.gmra.mrb[0].mxu0 %v259
        %v372 = vpop.f32.mrb[0].mxu0
        %v373 = vadd.f32 %v255, %v372
        %v374 = vpop.f32.mrb[0].mxu0
        %375 = vmatprep.mubr.f32.mxu0 0.0
        %376 = vmatmul.mubr.f32.gmra.mrb[0].mxu0 %v262
        %v377 = vpop.f32.mrb[0].mxu0
        %v378 = vadd.f32 %v255, %v377
        %v379 = vpop.f32.mrb[0].mxu0
        %380 = vmatprep.mubr.f32.mxu0 0.0
        %381 = vmatmul.mubr.f32.gmra.mrb[0].mxu0 %v265
        %v382 = vpop.f32.mrb[0].mxu0
        %v383 = vadd.f32 %v255, %v382
        %v384 = vpop.f32.mrb[0].mxu0
        %385 = vmatprep.mubr.f32.mxu0 0.0
        %386 = vmatmul.mubr.f32.gmra.mrb[0].mxu0 %v268
        %v387 = vpop.f32.mrb[0].mxu0
        %v388 = vadd.f32 %v255, %v387
        %v389 = vpop.f32.mrb[0].mxu0
        %390 = vmatprep.mubr.f32.mxu0 0.0
        %391 = vmatmul.mubr.f32.gmra.mrb[0].mxu0 %v271
        %v392 = vpop.f32.mrb[0].mxu0
        %v393 = vadd.f32 %v255, %v392
        %v394 = vpop.f32.mrb[0].mxu0
        %395 = vmatprep.mubr.f32.mxu0 0.0
        %396 = vmatmul.mubr.f32.gmra.mrb[0].mxu0 %v274
        %v397 = vpop.f32.mrb[0].mxu0
        %v398 = vadd.f32 %v255, %v397
        %v399 = vpop.f32.mrb[0].mxu0
        %400 = vmatprep.mubr.f32.mxu0 0.0
        %401 = vmatmul.mubr.f32.gmra.mrb[0].mxu0 %v277
        %v402 = vpop.f32.mrb[0].mxu0
        %v403 = vadd.f32 %v255, %v402
        %v404 = vpop.f32.mrb[0].mxu0
        %405 = vmatprep.mubr.f32.mxu0 0.0
        %406 = vmatmul.mubr.f32.gmra.mrb[0].mxu0 %v280
        %v407 = vpop.f32.mrb[0].mxu0
        %v408 = vadd.f32 %v255, %v407
        %v409 = vpop.f32.mrb[0].mxu0
        %410 = vmatprep.mubr.f32.mxu0 0.0
        %411 = vmatmul.mubr.f32.gmra.mrb[0].mxu0 %v283
        %v412 = vpop.f32.mrb[0].mxu0
        %v413 = vadd.f32 %v255, %v412
        %v414 = vpop.f32.mrb[0].mxu0
        %415 = vmatprep.mubr.f32.mxu0 0.0
        %416 = vmatmul.mubr.f32.gmra.mrb[0].mxu0 %v286
        %v417 = vpop.f32.mrb[0].mxu0
        %v418 = vadd.f32 %v255, %v417
        %v419 = vpop.f32.mrb[0].mxu0
        %420 = vmatprep.mubr.f32.mxu0 0.0
        %421 = vmatmul.mubr.f32.gmra.mrb[0].mxu0 %v289
        %v422 = vpop.f32.mrb[0].mxu0
        %v423 = vadd.f32 %v255, %v422
        %v424 = vpop.f32.mrb[0].mxu0
        %425 = vmatprep.mubr.f32.mxu0 0.0
        %426 = vmatmul.mubr.f32.gmra.mrb[0].mxu0 %v292
        %v427 = vpop.f32.mrb[0].mxu0
        %v428 = vadd.f32 %v255, %v427
        %v429 = vpop.f32.mrb[0].mxu0
        %430 = vmatprep.mubr.f32.mxu0 0.0
        %431 = vmatmul.mubr.f32.gmra.mrb[0].mxu0 %v295
        %v432 = vpop.f32.mrb[0].mxu0
        %v433 = vadd.f32 %v255, %v432
        %v434 = vpop.f32.mrb[0].mxu0
        %435 = vmatprep.mubr.f32.mxu0 0.0
        %436 = vmatmul.mubr.f32.gmra.mrb[0].mxu0 %v298
        %v437 = vpop.f32.mrb[0].mxu0
        %v438 = vadd.f32 %v255, %v437
        %v439 = vpop.f32.mrb[0].mxu0
        %440 = vmatprep.mubr.f32.mxu0 0.0
        %441 = vmatmul.mubr.f32.gmra.mrb[0].mxu0 %v301
        %v442 = vpop.f32.mrb[0].mxu0
        %v443 = vadd.f32 %v255, %v442
        %v444 = vpop.f32.mrb[0].mxu0
        %445 = vmatprep.mubr.f32.mxu0 0.0
        %446 = vmatmul.mubr.f32.gmra.mrb[0].mxu0 %v304
        %v447 = vpop.f32.mrb[0].mxu0
        %v448 = vadd.f32 %v255, %v447
        %v449 = vpop.f32.mrb[0].mxu0
        %450 = vdwg.mxu0
        %v451 = vmax.f32 %v373, 0.0
        %v452 = vmax.f32 %v378, 0.0
        %v453 = vmax.f32 %v383, 0.0
        %v454 = vmax.f32 %v388, 0.0
        %v455 = vmax.f32 %v393, 0.0
        %v456 = vmax.f32 %v398, 0.0
        %v457 = vmax.f32 %v403, 0.0
        %v458 = vmax.f32 %v408, 0.0
        %v459 = vmax.f32 %v413, 0.0
        %v460 = vmax.f32 %v418, 0.0
        %v461 = vmax.f32 %v423, 0.0
        %v462 = vmax.f32 %v428, 0.0
        %v463 = vmax.f32 %v433, 0.0
        %v464 = vmax.f32 %v438, 0.0
        %v465 = vmax.f32 %v443, 0.0
        %v466 = vmax.f32 %v448, 0.0
        %v467 = vld [vmem:[%s3] sm:$0xff]
        %v468 = vld [vmem:[%s3 + $0x8] sm:$0xff]
        %v469 = vld [vmem:[%s3 + $0x10] sm:$0xff]
        %v470 = vld [vmem:[%s3 + $0x18] sm:$0xff]
        %v471 = vld [vmem:[%s3 + $0x20] sm:$0xff]
        %v472 = vld [vmem:[%s3 + $0x28] sm:$0xff]
        %v473 = vld [vmem:[%s3 + $0x30] sm:$0xff]
        %v474 = vld [vmem:[%s3 + $0x38] sm:$0xff]
        %v475 = vld [vmem:[%s3 + $0x40] sm:$0xff]
        %v476 = vld [vmem:[%s3 + $0x48] sm:$0xff]
        %v477 = vld [vmem:[%s3 + $0x50] sm:$0xff]
        %v478 = vld [vmem:[%s3 + $0x58] sm:$0xff]
        %v479 = vld [vmem:[%s3 + $0x60] sm:$0xff]
        %v480 = vld [vmem:[%s3 + $0x68] sm:$0xff]
        %v481 = vld [vmem:[%s3 + $0x70] sm:$0xff]
        %v482 = vld [vmem:[%s3 + $0x78] sm:$0xff]
        %v483 = vld [vmem:[%s4] sm:$0x1]
        %v485 = vlaneseq
        %v486 = vshrl.u32 %v485, 7
        %v487 = vsub.s32 0, %v486
        %v488 = vrot.slane %v483, %v487
        %490 = vmatprep.subr.mxu0 0.0
        %491 = vmatpush1.msra.mxu0 %v467
        %492 = vmatprep.subr.mxu0 0.0
        %493 = vmatpush1.msra.mxu0 %v468
        %494 = vmatprep.subr.mxu0 0.0
        %495 = vmatpush1.msra.mxu0 %v469
        %496 = vmatprep.subr.mxu0 0.0
        %497 = vmatpush1.msra.mxu0 %v470
        %498 = vmatprep.subr.mxu0 0.0
        %499 = vmatpush1.msra.mxu0 %v471
        %500 = vmatprep.subr.mxu0 0.0
        %501 = vmatpush1.msra.mxu0 %v472
        %502 = vmatprep.subr.mxu0 0.0
        %503 = vmatpush1.msra.mxu0 %v473
        %504 = vmatprep.subr.mxu0 0.0
        %505 = vmatpush1.msra.mxu0 %v474
        %506 = vmatprep.subr.mxu0 0.0
        %507 = vmatpush1.msra.mxu0 %v475
        %508 = vmatprep.subr.mxu0 0.0
        %509 = vmatpush1.msra.mxu0 %v476
        %510 = vmatprep.subr.mxu0 0.0
        %511 = vmatpush1.msra.mxu0 %v477
        %512 = vmatprep.subr.mxu0 0.0
        %513 = vmatpush1.msra.mxu0 %v478
        %514 = vmatprep.subr.mxu0 0.0
        %515 = vmatpush1.msra.mxu0 %v479
        %516 = vmatprep.subr.mxu0 0.0
        %517 = vmatpush1.msra.mxu0 %v480
        %518 = vmatprep.subr.mxu0 0.0
        %519 = vmatpush1.msra.mxu0 %v481
        %520 = vmatprep.subr.mxu0 0.0
        %521 = vmatpush1.msra.mxu0 %v482
        %522 = vmatprep.subr.mxu0 0.0
        %523 = vmatpush1.msra.mxu0 0.0
        %524 = vmatprep.subr.mxu0 0.0
        %525 = vmatpush1.msra.mxu0 0.0
        %526 = vmatprep.subr.mxu0 0.0
        %527 = vmatpush1.msra.mxu0 0.0
        %528 = vmatprep.subr.mxu0 0.0
        %529 = vmatpush1.msra.mxu0 0.0
        %530 = vmatprep.subr.mxu0 0.0
        %531 = vmatpush1.msra.mxu0 0.0
        %532 = vmatprep.subr.mxu0 0.0
        %533 = vmatpush1.msra.mxu0 0.0
        %534 = vmatprep.subr.mxu0 0.0
        %535 = vmatpush1.msra.mxu0 0.0
        %536 = vmatprep.subr.mxu0 0.0
        %537 = vmatpush1.msra.mxu0 0.0
        %538 = vmatprep.subr.mxu0 0.0
        %539 = vmatpush1.msra.mxu0 0.0
        %540 = vmatprep.subr.mxu0 0.0
        %541 = vmatpush1.msra.mxu0 0.0
        %542 = vmatprep.subr.mxu0 0.0
        %543 = vmatpush1.msra.mxu0 0.0
        %544 = vmatprep.subr.mxu0 0.0
        %545 = vmatpush1.msra.mxu0 0.0
        %546 = vmatprep.subr.mxu0 0.0
        %547 = vmatpush1.msra.mxu0 0.0
        %548 = vmatprep.subr.mxu0 0.0
        %549 = vmatpush1.msra.mxu0 0.0
        %550 = vmatprep.subr.mxu0 0.0
        %551 = vmatpush1.msra.mxu0 0.0
        %552 = vmatprep.subr.mxu0 0.0
        %553 = vmatpush1.msra.mxu0 0.0
        %554 = vmatprep.mubr.f32.mxu0 0.0
        %555 = vmatmul.mubr.f32.gmra.mrb[0].mxu0 %v451
        %v556 = vpop.f32.mrb[0].mxu0
        %v557 = vadd.f32 %v488, %v556
        %v558 = vpop.f32.mrb[0].mxu0
        %559 = vmatprep.mubr.f32.mxu0 0.0
        %560 = vmatmul.mubr.f32.gmra.mrb[0].mxu0 %v452
        %v561 = vpop.f32.mrb[0].mxu0
        %v562 = vadd.f32 %v488, %v561
        %v563 = vpop.f32.mrb[0].mxu0
        %564 = vmatprep.mubr.f32.mxu0 0.0
        %565 = vmatmul.mubr.f32.gmra.mrb[0].mxu0 %v453
        %v566 = vpop.f32.mrb[0].mxu0
        %v567 = vadd.f32 %v488, %v566
        %v568 = vpop.f32.mrb[0].mxu0
        %569 = vmatprep.mubr.f32.mxu0 0.0
        %570 = vmatmul.mubr.f32.gmra.mrb[0].mxu0 %v454
        %v571 = vpop.f32.mrb[0].mxu0
        %v572 = vadd.f32 %v488, %v571
        %v573 = vpop.f32.mrb[0].mxu0
        %574 = vmatprep.mubr.f32.mxu0 0.0
        %575 = vmatmul.mubr.f32.gmra.mrb[0].mxu0 %v455
        %v576 = vpop.f32.mrb[0].mxu0
        %v577 = vadd.f32 %v488, %v576
        %v578 = vpop.f32.mrb[0].mxu0
        %579 = vmatprep.mubr.f32.mxu0 0.0
        %580 = vmatmul.mubr.f32.gmra.mrb[0].mxu0 %v456
        %v581 = vpop.f32.mrb[0].mxu0
        %v582 = vadd.f32 %v488, %v581
        %v583 = vpop.f32.mrb[0].mxu0
        %584 = vmatprep.mubr.f32.mxu0 0.0
        %585 = vmatmul.mubr.f32.gmra.mrb[0].mxu0 %v457
        %v586 = vpop.f32.mrb[0].mxu0
        %v587 = vadd.f32 %v488, %v586
        %v588 = vpop.f32.mrb[0].mxu0
        %589 = vmatprep.mubr.f32.mxu0 0.0
        %590 = vmatmul.mubr.f32.gmra.mrb[0].mxu0 %v458
        %v591 = vpop.f32.mrb[0].mxu0
        %v592 = vadd.f32 %v488, %v591
        %v593 = vpop.f32.mrb[0].mxu0
        %594 = vmatprep.mubr.f32.mxu0 0.0
        %595 = vmatmul.mubr.f32.gmra.mrb[0].mxu0 %v459
        %v596 = vpop.f32.mrb[0].mxu0
        %v597 = vadd.f32 %v488, %v596
        %v598 = vpop.f32.mrb[0].mxu0
        %599 = vmatprep.mubr.f32.mxu0 0.0
        %600 = vmatmul.mubr.f32.gmra.mrb[0].mxu0 %v460
        %v601 = vpop.f32.mrb[0].mxu0
        %v602 = vadd.f32 %v488, %v601
        %v603 = vpop.f32.mrb[0].mxu0
        %604 = vmatprep.mubr.f32.mxu0 0.0
        %605 = vmatmul.mubr.f32.gmra.mrb[0].mxu0 %v461
        %v606 = vpop.f32.mrb[0].mxu0
        %v607 = vadd.f32 %v488, %v606
        %v608 = vpop.f32.mrb[0].mxu0
        %609 = vmatprep.mubr.f32.mxu0 0.0
        %610 = vmatmul.mubr.f32.gmra.mrb[0].mxu0 %v462
        %v611 = vpop.f32.mrb[0].mxu0
        %v612 = vadd.f32 %v488, %v611
        %v613 = vpop.f32.mrb[0].mxu0
        %614 = vmatprep.mubr.f32.mxu0 0.0
        %615 = vmatmul.mubr.f32.gmra.mrb[0].mxu0 %v463
        %v616 = vpop.f32.mrb[0].mxu0
        %v617 = vadd.f32 %v488, %v616
        %v618 = vpop.f32.mrb[0].mxu0
        %619 = vmatprep.mubr.f32.mxu0 0.0
        %620 = vmatmul.mubr.f32.gmra.mrb[0].mxu0 %v464
        %v621 = vpop.f32.mrb[0].mxu0
        %v622 = vadd.f32 %v488, %v621
        %v623 = vpop.f32.mrb[0].mxu0
        %624 = vmatprep.mubr.f32.mxu0 0.0
        %625 = vmatmul.mubr.f32.gmra.mrb[0].mxu0 %v465
        %v626 = vpop.f32.mrb[0].mxu0
        %v627 = vadd.f32 %v488, %v626
        %v628 = vpop.f32.mrb[0].mxu0
        %629 = vmatprep.mubr.f32.mxu0 0.0
        %630 = vmatmul.mubr.f32.gmra.mrb[0].mxu0 %v466
        %v631 = vpop.f32.mrb[0].mxu0
        %v632 = vadd.f32 %v488, %v631
        %v633 = vpop.f32.mrb[0].mxu0
        %634 = vdwg.mxu0
        %v635 = vmax.f32 %v557, 0.0
        %v636 = vmax.f32 %v562, 0.0
        %v637 = vmax.f32 %v567, 0.0
        %v638 = vmax.f32 %v572, 0.0
        %v639 = vmax.f32 %v577, 0.0
        %v640 = vmax.f32 %v582, 0.0
        %v641 = vmax.f32 %v587, 0.0
        %v642 = vmax.f32 %v592, 0.0
        %v643 = vmax.f32 %v597, 0.0
        %v644 = vmax.f32 %v602, 0.0
        %v645 = vmax.f32 %v607, 0.0
        %v646 = vmax.f32 %v612, 0.0
        %v647 = vmax.f32 %v617, 0.0
        %v648 = vmax.f32 %v622, 0.0
        %v649 = vmax.f32 %v627, 0.0
        %v650 = vmax.f32 %v632, 0.0
        %651 = vst [vmem:[%s218] sm:$0xff] %v635
        %652 = vst [vmem:[%s218 + $0x8] sm:$0xff] %v636
        %653 = vst [vmem:[%s218 + $0x10] sm:$0xff] %v637
        %654 = vst [vmem:[%s218 + $0x18] sm:$0xff] %v638
        %655 = vst [vmem:[%s218 + $0x20] sm:$0xff] %v639
        %656 = vst [vmem:[%s218 + $0x28] sm:$0xff] %v640
        %657 = vst [vmem:[%s218 + $0x30] sm:$0xff] %v641
        %658 = vst [vmem:[%s218 + $0x38] sm:$0xff] %v642
        %659 = vst [vmem:[%s218 + $0x40] sm:$0xff] %v643
        %660 = vst [vmem:[%s218 + $0x48] sm:$0xff] %v644
        %661 = vst [vmem:[%s218 + $0x50] sm:$0xff] %v645
        %662 = vst [vmem:[%s218 + $0x58] sm:$0xff] %v646
        %663 = vst [vmem:[%s218 + $0x60] sm:$0xff] %v647
        %664 = vst [vmem:[%s218 + $0x68] sm:$0xff] %v648
        %665 = vst [vmem:[%s218 + $0x70] sm:$0xff] %v649
        %666 = vst [vmem:[%s218 + $0x78] sm:$0xff] %v650
        %s667 = sand.u32 %s137, 1
        %s668 = scalar_lea.sflag [#allocation3], %s667
        %s669 = sand.u32 %s137, 1
        %s670 = smul.addr %s669, 128
        %s671 = scalar_lea.vmem [#allocation2], %s670
        // Predicated region
        $region41: #{tpu_custom_call.1} parent=39 // pred_check
          %p672 = pneg %p147
        $region42: #{tpu_custom_call.1} parent=39 // pred_check_branch
          %674 = sbr.rel (%p672) target = $region44
        $region43: #{tpu_custom_call.1} parent=39 // pred_region
          %s675 = smul.u32 16, %s19
          %s677 = ssub.s32 2048, 2048
          %678 = vsyncadd %s668, %s677
          %s679 = smul.addr %s675, 128
          %s680 = scalar_lea.hbm %s5, %s679
          %s681 = sshll.u32 %s671, 4
          %s682 = int_to_ptr.vmem [resolvable:$true] %s681
          %687 = dma.vmem_to_hbm [thread:$0]  %s682, 2048, %s680, %s668, 128, 128, 8
        $region44: #{tpu_custom_call.1} parent=39 // pred_fallthru
          _
      $region40: #{tpu_custom_call.1} parent=5 // pred_fallthru
        _
      %p688 = scmp.le.s32.totalorder 2, %s14
      // Predicated region
      $region45: #{tpu_custom_call.1} parent=5 // pred_check
        %p689 = pneg %p688
      $region46: #{tpu_custom_call.1} parent=5 // pred_check_branch
        %691 = sbr.rel (%p689) target = $region48
      $region47: #{tpu_custom_call.1} parent=5 // pred_region
        %s692 = ssub.s32 %s14, 2
        // Predicated region
        $region49: #{tpu_custom_call.1} parent=47 // pred_check
          %p693 = pneg %p153
        $region50: #{tpu_custom_call.1} parent=47 // pred_check_branch
          %695 = sbr.rel (%p693) target = $region52
        $region51: #{tpu_custom_call.1} parent=47 // pred_region
          %s696 = sand.u32 %s138, 1
          %s697 = scalar_lea.sflag [#allocation3], %s696
          %s698 = sand.u32 %s138, 1
          %s699 = smul.addr %s698, 128
          %s700 = scalar_lea.vmem [#allocation2], %s699
          %701 = dma.done %s697, 2048
        $region52: #{tpu_custom_call.1} parent=47 // pred_fallthru
          _
      $region48: #{tpu_custom_call.1} parent=5 // pred_fallthru
        _
    $region6: #{tpu_custom_call.1} parent=1 // loop_footer
      %s18 = sadd.s32 1, %s14
    $region7: #{tpu_custom_call.1} parent=1 // loop_footer_branch
      %13 = sbr.rel target = $region3
    $region8: #{tpu_custom_call.1} parent=1 // loop_exit
      _
    %702 = vsyncpa [#allocation3], 1
    %s703 = scalar_lea.sflag [#allocation3], 1
    %704 = vsyncpa %s703, 1

</llo_original>
